<compile_context>
chip_gen: v7x
topology: tpu7x:2x2x1
jax: 0.10.0
libtpu: 0.0.40
codegen_flags: <defaults>
</compile_context>

<pallas_src>
import math

import jax
import jax.numpy as jnp
from jax.experimental import pallas as pl
from jax.experimental.pallas import tpu as pltpu

# ----------------------------- static config -------------------------------
TILE_SLEN = 4
PTILE_SLEN = 8
BP = (PTILE_SLEN - TILE_SLEN) // 2          # border padding = 2
N_BANDS = 2
GAL_DIM = 8                                  # galaxy latent dimension
D_FEAT = N_BANDS * PTILE_SLEN * PTILE_SLEN   # 128 features per padded tile
TM_MAX = 512                                 # ptile rows per grid step (cap)

# packed output layout (single lane-packed slab, 16 columns):
#   col 0      : n_source_probs
#   col 1      : n_sources / tile_is_on (0.0 or 1.0; cast to int in wrapper)
#   cols 2:4   : locs
#   cols 4:6   : locs_sd
#   col 6      : galaxy_bools
#   cols 7:15  : galaxy_params
#   col 15     : unused (zero)
OUT_W = 16

# fused weight column layout (inputs to the single matmul):
#   cols 0:5   : detection head  (prob logit, loc_h, loc_w, sd_h raw, sd_w raw)
#   col  5     : binary head logit
#   cols 6:14  : galaxy head
#   cols 14:16 : zero padding


def _round_up(x, m):
    return -(-x // m) * m


# ------------------------------ Pallas kernel ------------------------------
def _encode_ptiles_kernel(x_ref, wcat_ref, bcat_ref, wloc_ref, out_ref):
    x = x_ref[...]                                                   # (TM, 128)

    # single fused MXU pass for detection + binary + galaxy heads
    y = jnp.dot(x, wcat_ref[...], preferred_element_type=jnp.float32)
    y = y + bcat_ref[...]                                            # (TM, 16)

    # --- detection encoder head -------------------------------------------
    n_source_probs = jax.nn.sigmoid(y[:, 0:1])                       # (TM, 1)
    locs_mean = jax.nn.sigmoid(y[:, 1:3])                            # (TM, 2)
    locs_sd_raw = jax.nn.softplus(y[:, 3:5])                         # (TM, 2)

    # n_sources = probs.ge(0.5).long(); tile_is_on = n -> n 1
    tile_is_on = (n_source_probs >= 0.5).astype(jnp.float32)         # (TM, 1)
    locs = locs_mean * tile_is_on
    locs_sd = locs_sd_raw * tile_is_on

    # --- location-conditioned terms (K=2) as VPU broadcast-FMAs ------------
    # wloc columns 0:5 are zero, so detection columns are untouched.
    y = y + locs[:, 0:1] * wloc_ref[0:1, :] + locs[:, 1:2] * wloc_ref[1:2, :]

    # --- binary encoder head: star/galaxy probability ----------------------
    galaxy_probs = jax.nn.sigmoid(y[:, 5:6])                         # (TM, 1)
    galaxy_bools = (galaxy_probs >= 0.5).astype(jnp.float32) * tile_is_on

    # --- galaxy encoder head: latent shape parameters ----------------------
    # reference does `galaxy_params *= tile_is_on * galaxy_bools`; galaxy_bools
    # already carries the tile_is_on factor, so a single multiply is identical.
    galaxy_params = y[:, 6:14] * galaxy_bools                        # (TM, 8)

    packed = jnp.concatenate(
        [n_source_probs, tile_is_on, locs, locs_sd, galaxy_bools,
         galaxy_params, jnp.zeros_like(n_source_probs)], axis=1)     # (TM, 16)
    out_ref[...] = packed


def _encode_ptiles_pallas(fused, ptiles_flat):
    """ptiles_flat: (N, D_FEAT) float32 -> dict of per-ptile variational params."""
    n = ptiles_flat.shape[0]
    tm = min(TM_MAX, max(8, _round_up(n, 8)))
    n_pad = _round_up(n, tm)
    if n_pad != n:
        ptiles_flat = jnp.pad(ptiles_flat, ((0, n_pad - n), (0, 0)))
    grid = (n_pad // tm,)

    out = pl.pallas_call(
        _encode_ptiles_kernel,
        out_shape=jax.ShapeDtypeStruct((n_pad, OUT_W), jnp.float32),
        grid_spec=pltpu.PrefetchScalarGridSpec(
            num_scalar_prefetch=0,
            grid=grid,
            in_specs=[
                pl.BlockSpec((tm, D_FEAT), lambda i: (i, 0)),      # x rows
                pl.BlockSpec((D_FEAT, OUT_W), lambda i: (0, 0)),   # fused W
                pl.BlockSpec((1, OUT_W), lambda i: (0, 0)),        # fused bias
                pl.BlockSpec((2, OUT_W), lambda i: (0, 0)),        # loc weights
            ],
            out_specs=pl.BlockSpec((tm, OUT_W), lambda i: (i, 0)),
        ),
        compiler_params=pltpu.CompilerParams(
            dimension_semantics=("parallel",)),
    )(ptiles_flat, fused["w_cat"], fused["b_cat"], fused["w_loc"])

    out = out[:n]
    return {
        "n_sources": out[:, 1].astype(jnp.int32),   # (np,)
        "n_source_probs": out[:, 0:1],              # (np, 1)
        "locs": out[:, 2:4],                        # (np, 2)
        "locs_sd": out[:, 4:6],                     # (np, 2)
        "galaxy_bools": out[:, 6:7],                # (np, 1)
        "galaxy_params": out[:, 7:15],              # (np, GAL_DIM)
    }


# ------------------------------ JAX glue -----------------------------------
def get_images_in_tiles(images, tile_slen, ptile_slen):
    """(b, c, h, w) -> (b, nth, ntw, c, ptile_slen, ptile_slen) overlapping tiles.

    Vectorized: since ptile_slen == 2 * tile_slen, each padded tile is the 2x2
    block of non-overlapping tile_slen x tile_slen sub-tiles, so the extraction
    is 4 strided slices + 3 concats (no Python loop over tile indices).
    """
    assert ptile_slen == 2 * tile_slen
    b, c, h, w = images.shape
    nh, nw = h // tile_slen, w // tile_slen
    t = images.reshape(b, c, nh, tile_slen, nw, tile_slen)
    t = t.transpose(0, 1, 2, 4, 3, 5)                  # (b, c, nh, nw, ts, ts)
    tl = t[:, :, :-1, :-1]
    tr = t[:, :, :-1, 1:]
    bl = t[:, :, 1:, :-1]
    br = t[:, :, 1:, 1:]
    top = jnp.concatenate([tl, tr], axis=-1)           # (b, c, nth, ntw, ts, 2ts)
    bot = jnp.concatenate([bl, br], axis=-1)
    ptiles = jnp.concatenate([top, bot], axis=-2)      # (b, c, nth, ntw, pt, pt)
    return ptiles.transpose(0, 2, 3, 1, 4, 5)          # (b, nth, ntw, c, pt, pt)


def _fuse_params(params):
    """Pack the three x-weight heads + loc terms into lane-friendly fused arrays."""
    w_cat = jnp.zeros((D_FEAT, OUT_W), jnp.float32)
    w_cat = w_cat.at[:, 0:5].set(params["w_det"])
    w_cat = w_cat.at[:, 5:6].set(params["w_bin"])
    w_cat = w_cat.at[:, 6:14].set(params["w_gal"])

    b_cat = jnp.zeros((1, OUT_W), jnp.float32)
    b_cat = b_cat.at[:, 0:5].set(params["b_det"])
    b_cat = b_cat.at[:, 5:6].set(params["b_bin"])
    b_cat = b_cat.at[:, 6:14].set(params["b_gal"])

    w_loc = jnp.zeros((2, OUT_W), jnp.float32)
    w_loc = w_loc.at[:, 5:6].set(params["w_bin_loc"])
    w_loc = w_loc.at[:, 6:14].set(params["w_gal_loc"])

    return {"w_cat": w_cat, "b_cat": b_cat, "w_loc": w_loc}


class PallasEncoder:
    """JAX/Pallas port of bliss Encoder.variational_mode orchestration."""

    def __init__(self, params, n_images_per_batch=10, n_rows_per_batch=15):
        self.fused = _fuse_params(params)
        self.tile_slen = TILE_SLEN
        self.ptile_slen = PTILE_SLEN
        self.bp = BP
        # Kept for API parity; the GPU-memory chunking (image/row batches +
        # _collate concatenation) is unnecessary on TPU — a single pallas_call
        # covers all ptiles and produces the identical concatenated result.
        self.n_images_per_batch = n_images_per_batch
        self.n_rows_per_batch = n_rows_per_batch

    def _encode_ptiles(self, flat_image_ptiles):
        n = flat_image_ptiles.shape[0]
        x = flat_image_ptiles.reshape(n, -1).astype(jnp.float32)  # (n, C*ph*pw)
        return _encode_ptiles_pallas(self.fused, x)

    def variational_mode(self, image):
        # TODO(synk): in-kernel window extraction (memory_space=pl.ANY) would
        # remove the ~4x HBM duplication of overlapping 8x8 windows; extraction
        # is done here as one vectorized XLA op instead of the Python loop.
        ptiles = get_images_in_tiles(image, self.tile_slen, self.ptile_slen)
        b, nth, ntw, c, ph, pw = ptiles.shape
        tile_map = self._encode_ptiles(ptiles.reshape(b * nth * ntw, c, ph, pw))
        # squeeze(0) of the reference is a no-op here (dim 0 > 1).
        # TODO(synk): TileCatalog.from_flat_dict wrapper class not ported;
        # returning the flat collated tile dictionary instead.
        return tile_map


# ------------------------------ parameters ---------------------------------
def init_params(key):
    ks = jax.random.split(key, 8)
    s = 0.1
    return {
        "w_det": (jax.random.normal(ks[0], (D_FEAT, 5)) * s).astype(jnp.float32),
        "b_det": (jax.random.normal(ks[1], (1, 5)) * s).astype(jnp.float32),
        "w_bin": (jax.random.normal(ks[2], (D_FEAT, 1)) * s).astype(jnp.float32),
        "w_bin_loc": (jax.random.normal(ks[3], (2, 1)) * s).astype(jnp.float32),
        "b_bin": (jax.random.normal(ks[4], (1, 1)) * s).astype(jnp.float32),
        "w_gal": (jax.random.normal(ks[5], (D_FEAT, GAL_DIM)) * s).astype(jnp.float32),
        "w_gal_loc": (jax.random.normal(ks[6], (2, GAL_DIM)) * s).astype(jnp.float32),
        "b_gal": (jax.random.normal(ks[7], (1, GAL_DIM)) * s).astype(jnp.float32),
    }


if __name__ == "__main__":
    key = jax.random.PRNGKey(0)
    pkey, ikey = jax.random.split(key)
    params = init_params(pkey)

    # image: (n=2, n_bands=2, H=20, W=20) -> 4x4 tiles of slen 4 (bp=2) per image
    image = jax.random.normal(ikey, (2, N_BANDS, 20, 20), dtype=jnp.float32)

    enc = PallasEncoder(params)
    tile_map = enc.variational_mode(image)
    tile_map = jax.block_until_ready(tile_map)

    n_total = 2 * 4 * 4  # n * n_tiles_h * n_tiles_w
    assert tile_map["n_sources"].shape == (n_total,)
    assert tile_map["n_source_probs"].shape == (n_total, 1)
    assert tile_map["locs"].shape == (n_total, 2)
    assert tile_map["locs_sd"].shape == (n_total, 2)
    assert tile_map["galaxy_bools"].shape == (n_total, 1)
    assert tile_map["galaxy_params"].shape == (n_total, GAL_DIM)
    for v in tile_map.values():
        assert bool(jnp.all(jnp.isfinite(v.astype(jnp.float32))))

    print("KERNEL_OK")
</pallas_src>

<mosaic_0001>
module attributes {stable_mosaic.version = 11 : i64} {
  func.func @_encode_ptiles_kernel(%arg0: i32, %arg1: memref<32x128xf32, #tpu.memory_space<vmem>>, %arg2: memref<128x16xf32, #tpu.memory_space<vmem>>, %arg3: memref<1x16xf32, #tpu.memory_space<vmem>>, %arg4: memref<2x16xf32, #tpu.memory_space<vmem>>, %arg5: memref<32x16xf32, #tpu.memory_space<vmem>>) attributes {dimension_semantics = [#tpu.dimension_semantics<parallel>], iteration_bounds = array<i64: 1>, scalar_prefetch = 0 : i64, scratch_operands = 0 : i64, tpu.core_type = #tpu.core_type<tc>, window_params = [{transform_indices = @transform_0, window_bounds = array<i64: 32, 128>}, {pipeline_mode = #tpu.pipeline_mode<synchronous>, transform_indices = @transform_1, window_bounds = array<i64: 128, 16>}, {pipeline_mode = #tpu.pipeline_mode<synchronous>, transform_indices = @transform_2, window_bounds = array<i64: 1, 16>}, {pipeline_mode = #tpu.pipeline_mode<synchronous>, transform_indices = @transform_3, window_bounds = array<i64: 2, 16>}, {transform_indices = @transform_4, window_bounds = array<i64: 32, 16>}]} {
    %c0 = arith.constant 0 : index
    %c0_0 = arith.constant 0 : index
    %0 = vector.load %arg1[%c0, %c0_0] : memref<32x128xf32, #tpu.memory_space<vmem>>, vector<32x128xf32>
    %c0_1 = arith.constant 0 : index
    %c0_2 = arith.constant 0 : index
    %1 = vector.load %arg2[%c0_1, %c0_2] : memref<128x16xf32, #tpu.memory_space<vmem>>, vector<128x16xf32>
    %cst = arith.constant dense<0.000000e+00> : vector<32x16xf32>
    %2 = tpu.matmul %0, %1, %cst {dimension_numbers = #tpu.dot_dimension_numbers<[1], [0], [0], [1], [0, 0, 1, 1], [], []>} : vector<32x128xf32>, vector<128x16xf32>, vector<32x16xf32> -> vector<32x16xf32>
    %c0_3 = arith.constant 0 : index
    %c0_4 = arith.constant 0 : index
    %3 = vector.load %arg3[%c0_3, %c0_4] : memref<1x16xf32, #tpu.memory_space<vmem>>, vector<1x16xf32>
    %4 = vector.broadcast %3 : vector<1x16xf32> to vector<32x16xf32>
    %5 = arith.addf %2, %4 : vector<32x16xf32>
    %6 = vector.extract_strided_slice %5 {offsets = [0, 0], sizes = [32, 1], strides = [1, 1]} : vector<32x16xf32> to vector<32x1xf32>
    %7 = arith.negf %6 : vector<32x1xf32>
    %8 = math.exp %7 : vector<32x1xf32>
    %cst_5 = arith.constant 1.000000e+00 : f32
    %9 = vector.broadcast %cst_5 : f32 to vector<32x1xf32>
    %10 = arith.addf %9, %8 : vector<32x1xf32>
    %11 = arith.divf %9, %10 : vector<32x1xf32>
    %12 = vector.extract_strided_slice %5 {offsets = [0, 1], sizes = [32, 2], strides = [1, 1]} : vector<32x16xf32> to vector<32x2xf32>
    %13 = arith.negf %12 : vector<32x2xf32>
    %14 = math.exp %13 : vector<32x2xf32>
    %cst_6 = arith.constant 1.000000e+00 : f32
    %15 = vector.broadcast %cst_6 : f32 to vector<32x2xf32>
    %16 = arith.addf %15, %14 : vector<32x2xf32>
    %17 = arith.divf %15, %16 : vector<32x2xf32>
    %18 = vector.extract_strided_slice %5 {offsets = [0, 3], sizes = [32, 2], strides = [1, 1]} : vector<32x16xf32> to vector<32x2xf32>
    %cst_7 = arith.constant 0.000000e+00 : f32
    %19 = vector.broadcast %cst_7 : f32 to vector<32x2xf32>
    %20 = arith.maximumf %18, %19 : vector<32x2xf32>
    %21 = vector.broadcast %cst_7 : f32 to vector<32x2xf32>
    %22 = arith.subf %18, %21 : vector<32x2xf32>
    %23 = arith.cmpf one, %22, %22 : vector<32x2xf32>
    %24 = vector.broadcast %cst_7 : f32 to vector<32x2xf32>
    %25 = arith.addf %18, %24 : vector<32x2xf32>
    %26 = math.absf %22 : vector<32x2xf32>
    %cst_8 = arith.constant 0.000000e+00 : f32
    %27 = vector.broadcast %cst_8 : f32 to vector<32x2xf32>
    %28 = arith.subf %27, %26 : vector<32x2xf32>
    %29 = math.exp %28 : vector<32x2xf32>
    %30 = math.log1p %29 : vector<32x2xf32>
    %31 = arith.addf %20, %30 : vector<32x2xf32>
    %32 = arith.select %23, %25, %31 : vector<32x2xi1>, vector<32x2xf32>
    %cst_9 = arith.constant 5.000000e-01 : f32
    %33 = vector.broadcast %cst_9 : f32 to vector<32x1xf32>
    %34 = arith.cmpf oge, %11, %33 : vector<32x1xf32>
    %35 = arith.extui %34 : vector<32x1xi1> to vector<32x1xi32>
    %36 = arith.sitofp %35 : vector<32x1xi32> to vector<32x1xf32>
    %37 = vector.broadcast %36 : vector<32x1xf32> to vector<32x2xf32>
    %38 = arith.mulf %17, %37 : vector<32x2xf32>
    %39 = vector.broadcast %36 : vector<32x1xf32> to vector<32x2xf32>
    %40 = arith.mulf %32, %39 : vector<32x2xf32>
    %41 = vector.extract_strided_slice %38 {offsets = [0, 0], sizes = [32, 1], strides = [1, 1]} : vector<32x2xf32> to vector<32x1xf32>
    %c0_10 = arith.constant 0 : index
    %c0_11 = arith.constant 0 : index
    %42 = vector.load %arg4[%c0_10, %c0_11] : memref<2x16xf32, #tpu.memory_space<vmem>>, vector<1x16xf32>
    %43 = vector.broadcast %41 : vector<32x1xf32> to vector<32x16xf32>
    %44 = vector.broadcast %42 : vector<1x16xf32> to vector<32x16xf32>
    %45 = arith.mulf %43, %44 : vector<32x16xf32>
    %46 = arith.addf %5, %45 : vector<32x16xf32>
    %47 = vector.extract_strided_slice %38 {offsets = [0, 1], sizes = [32, 1], strides = [1, 1]} : vector<32x2xf32> to vector<32x1xf32>
    %c1 = arith.constant 1 : index
    %c0_12 = arith.constant 0 : index
    %48 = vector.load %arg4[%c1, %c0_12] : memref<2x16xf32, #tpu.memory_space<vmem>>, vector<1x16xf32>
    %49 = vector.broadcast %47 : vector<32x1xf32> to vector<32x16xf32>
    %50 = vector.broadcast %48 : vector<1x16xf32> to vector<32x16xf32>
    %51 = arith.mulf %49, %50 : vector<32x16xf32>
    %52 = arith.addf %46, %51 : vector<32x16xf32>
    %53 = vector.extract_strided_slice %52 {offsets = [0, 5], sizes = [32, 1], strides = [1, 1]} : vector<32x16xf32> to vector<32x1xf32>
    %54 = arith.negf %53 : vector<32x1xf32>
    %55 = math.exp %54 : vector<32x1xf32>
    %cst_13 = arith.constant 1.000000e+00 : f32
    %56 = vector.broadcast %cst_13 : f32 to vector<32x1xf32>
    %57 = arith.addf %56, %55 : vector<32x1xf32>
    %58 = arith.divf %56, %57 : vector<32x1xf32>
    %cst_14 = arith.constant 5.000000e-01 : f32
    %59 = vector.broadcast %cst_14 : f32 to vector<32x1xf32>
    %60 = arith.cmpf oge, %58, %59 : vector<32x1xf32>
    %61 = arith.extui %60 : vector<32x1xi1> to vector<32x1xi32>
    %62 = arith.sitofp %61 : vector<32x1xi32> to vector<32x1xf32>
    %63 = arith.mulf %62, %36 : vector<32x1xf32>
    %64 = vector.extract_strided_slice %52 {offsets = [0, 6], sizes = [32, 8], strides = [1, 1]} : vector<32x16xf32> to vector<32x8xf32>
    %65 = vector.broadcast %63 : vector<32x1xf32> to vector<32x8xf32>
    %66 = arith.mulf %64, %65 : vector<32x8xf32>
    %cst_15 = arith.constant 0.000000e+00 : f32
    %67 = vector.broadcast %cst_15 : f32 to vector<32x1xf32>
    %68 = tpu.concatenate %11, %36, %38, %40, %63, %66, %67 in 1 : vector<32x1xf32>, vector<32x1xf32>, vector<32x2xf32>, vector<32x2xf32>, vector<32x1xf32>, vector<32x8xf32>, vector<32x1xf32> -> vector<32x16xf32>
    %c0_16 = arith.constant 0 : index
    %c0_17 = arith.constant 0 : index
    %69 = vector.load %arg5[%c0_16, %c0_17] : memref<32x16xf32, #tpu.memory_space<vmem>>, vector<32x16xf32>
    tpu.vector_store %arg5[%c0_16, %c0_17], %68 {strides = array<i32>} : memref<32x16xf32, #tpu.memory_space<vmem>>, vector<32x16xf32>,
    return
  }
  func.func @transform_0(%arg0: i32) -> (i32, i32) {
    %c0_i32 = arith.constant 0 : i32
    %c0_i32_0 = arith.constant 0 : i32
    return %arg0, %c0_i32 : i32, i32
  }
  func.func @transform_1(%arg0: i32) -> (i32, i32) {
    %c0_i32 = arith.constant 0 : i32
    %c0_i32_0 = arith.constant 0 : i32
    %c0_i32_1 = arith.constant 0 : i32
    return %c0_i32, %c0_i32_0 : i32, i32
  }
  func.func @transform_2(%arg0: i32) -> (i32, i32) {
    %c0_i32 = arith.constant 0 : i32
    %c0_i32_0 = arith.constant 0 : i32
    %c0_i32_1 = arith.constant 0 : i32
    return %c0_i32, %c0_i32_0 : i32, i32
  }
  func.func @transform_3(%arg0: i32) -> (i32, i32) {
    %c0_i32 = arith.constant 0 : i32
    %c0_i32_0 = arith.constant 0 : i32
    %c0_i32_1 = arith.constant 0 : i32
    return %c0_i32, %c0_i32_0 : i32, i32
  }
  func.func @transform_4(%arg0: i32) -> (i32, i32) {
    %c0_i32 = arith.constant 0 : i32
    %c0_i32_0 = arith.constant 0 : i32
    return %arg0, %c0_i32 : i32, i32
  }
}

</mosaic_0001>

<llo_original>
// kernel: tpu_custom_call.1
$region0: #{tpu_custom_call.1}
  #allocation0 [shape = 'u32[]', space=smem, size = 0x4, offset = 0x4, fixed_abs, tag = 'smem constant byte address 0x4 - core index']
  #allocation1 [shape = 'u32[144,128]{1,0:T(1,128)}', space=vmem, size = 0x12000, scoped, tag = 'internal scratch']
  %s0 = inlined_call_operand.vmem [shape: f32[32,128], index: 0, kind: input, shape index: {}]
  %s1 = inlined_call_operand.vmem [shape: f32[128,16], index: 1, kind: input, shape index: {}]
  %s2 = inlined_call_operand.vmem [shape: f32[1,16], index: 2, kind: input, shape index: {}]
  %s3 = inlined_call_operand.vmem [shape: f32[2,16], index: 3, kind: input, shape index: {}]
  %s4 = inlined_call_operand.vmem [shape: f32[32,16], index: 4, kind: output, shape index: {}]
  %s5 = sld [smem:[#allocation0]]
  $region26: #{tpu_custom_call.1} parent=0
    _
  %s7 = ssub.s32 1, %s5
  %s8 = scalar_select 0, %s7, %s5
  // Predicated region
  $region2: #{tpu_custom_call.1} parent=0 // pred_check
    _
  $region3: #{tpu_custom_call.1} parent=0 // pred_check_branch
    %10 = sbr.rel (0) target = $region5
  $region4: #{tpu_custom_call.1} parent=0 // pred_region
    _
  $region5: #{tpu_custom_call.1} parent=0 // pred_fallthru
    _
  // Predicated region
  $region6: #{tpu_custom_call.1} parent=0 // pred_check
    _
  $region7: #{tpu_custom_call.1} parent=0 // pred_check_branch
    %12 = sbr.rel (0) target = $region9
  $region8: #{tpu_custom_call.1} parent=0 // pred_region
    _
  $region9: #{tpu_custom_call.1} parent=0 // pred_fallthru
    _
  // Predicated region
  $region10: #{tpu_custom_call.1} parent=0 // pred_check
    _
  $region11: #{tpu_custom_call.1} parent=0 // pred_check_branch
    %14 = sbr.rel (0) target = $region13
  $region12: #{tpu_custom_call.1} parent=0 // pred_region
    _
  $region13: #{tpu_custom_call.1} parent=0 // pred_fallthru
    _
  // Predicated region
  $region14: #{tpu_custom_call.1} parent=0 // pred_check
    _
  $region15: #{tpu_custom_call.1} parent=0 // pred_check_branch
    %16 = sbr.rel (0) target = $region17
  $region16: #{tpu_custom_call.1} parent=0 // pred_region
    _
  $region17: #{tpu_custom_call.1} parent=0 // pred_fallthru
    _
  %v17 = vld [vmem:[%s0] sm:$0xff]
  %v18 = vld [vmem:[%s0 + $0x8] sm:$0xff]
  %v19 = vld [vmem:[%s0 + $0x10] sm:$0xff]
  %v20 = vld [vmem:[%s0 + $0x18] sm:$0xff]
  %v21 = vld [vmem:[%s1] sm:$0xff]
  %v22 = vld [vmem:[%s1 + $0x8] sm:$0xff]
  %v23 = vld [vmem:[%s1 + $0x10] sm:$0xff]
  %v24 = vld [vmem:[%s1 + $0x18] sm:$0xff]
  %v25 = vld [vmem:[%s1 + $0x20] sm:$0xff]
  %v26 = vld [vmem:[%s1 + $0x28] sm:$0xff]
  %v27 = vld [vmem:[%s1 + $0x30] sm:$0xff]
  %v28 = vld [vmem:[%s1 + $0x38] sm:$0xff]
  %v29 = vld [vmem:[%s1 + $0x40] sm:$0xff]
  %v30 = vld [vmem:[%s1 + $0x48] sm:$0xff]
  %v31 = vld [vmem:[%s1 + $0x50] sm:$0xff]
  %v32 = vld [vmem:[%s1 + $0x58] sm:$0xff]
  %v33 = vld [vmem:[%s1 + $0x60] sm:$0xff]
  %v34 = vld [vmem:[%s1 + $0x68] sm:$0xff]
  %v35 = vld [vmem:[%s1 + $0x70] sm:$0xff]
  %v36 = vld [vmem:[%s1 + $0x78] sm:$0xff]
  %v37 = vld [vmem:[%s2] sm:$0x1]
  %v39 = vlaneseq
  %v40 = vshrl.u32 %v39, 7
  %v41 = vsub.s32 0, %v40
  %v42 = vrot.slane %v37, %v41
  %44 = vmatprep.subr.mxu0 0.0
  %45 = vmatpush1.msra.mxu0 %v21
  %46 = vmatprep.subr.mxu0 0.0
  %47 = vmatpush1.msra.mxu0 %v22
  %48 = vmatprep.subr.mxu0 0.0
  %49 = vmatpush1.msra.mxu0 %v23
  %50 = vmatprep.subr.mxu0 0.0
  %51 = vmatpush1.msra.mxu0 %v24
  %52 = vmatprep.subr.mxu0 0.0
  %53 = vmatpush1.msra.mxu0 %v25
  %54 = vmatprep.subr.mxu0 0.0
  %55 = vmatpush1.msra.mxu0 %v26
  %56 = vmatprep.subr.mxu0 0.0
  %57 = vmatpush1.msra.mxu0 %v27
  %58 = vmatprep.subr.mxu0 0.0
  %59 = vmatpush1.msra.mxu0 %v28
  %60 = vmatprep.subr.mxu0 0.0
  %61 = vmatpush1.msra.mxu0 %v29
  %62 = vmatprep.subr.mxu0 0.0
  %63 = vmatpush1.msra.mxu0 %v30
  %64 = vmatprep.subr.mxu0 0.0
  %65 = vmatpush1.msra.mxu0 %v31
  %66 = vmatprep.subr.mxu0 0.0
  %67 = vmatpush1.msra.mxu0 %v32
  %68 = vmatprep.subr.mxu0 0.0
  %69 = vmatpush1.msra.mxu0 %v33
  %70 = vmatprep.subr.mxu0 0.0
  %71 = vmatpush1.msra.mxu0 %v34
  %72 = vmatprep.subr.mxu0 0.0
  %73 = vmatpush1.msra.mxu0 %v35
  %74 = vmatprep.subr.mxu0 0.0
  %75 = vmatpush1.msra.mxu0 %v36
  %76 = vmatprep.subr.mxu0 0.0
  %77 = vmatpush1.msra.mxu0 0.0
  %78 = vmatprep.subr.mxu0 0.0
  %79 = vmatpush1.msra.mxu0 0.0
  %80 = vmatprep.subr.mxu0 0.0
  %81 = vmatpush1.msra.mxu0 0.0
  %82 = vmatprep.subr.mxu0 0.0
  %83 = vmatpush1.msra.mxu0 0.0
  %84 = vmatprep.subr.mxu0 0.0
  %85 = vmatpush1.msra.mxu0 0.0
  %86 = vmatprep.subr.mxu0 0.0
  %87 = vmatpush1.msra.mxu0 0.0
  %88 = vmatprep.subr.mxu0 0.0
  %89 = vmatpush1.msra.mxu0 0.0
  %90 = vmatprep.subr.mxu0 0.0
  %91 = vmatpush1.msra.mxu0 0.0
  %92 = vmatprep.subr.mxu0 0.0
  %93 = vmatpush1.msra.mxu0 0.0
  %94 = vmatprep.subr.mxu0 0.0
  %95 = vmatpush1.msra.mxu0 0.0
  %96 = vmatprep.subr.mxu0 0.0
  %97 = vmatpush1.msra.mxu0 0.0
  %98 = vmatprep.subr.mxu0 0.0
  %99 = vmatpush1.msra.mxu0 0.0
  %100 = vmatprep.subr.mxu0 0.0
  %101 = vmatpush1.msra.mxu0 0.0
  %102 = vmatprep.subr.mxu0 0.0
  %103 = vmatpush1.msra.mxu0 0.0
  %104 = vmatprep.subr.mxu0 0.0
  %105 = vmatpush1.msra.mxu0 0.0
  %106 = vmatprep.subr.mxu0 0.0
  %107 = vmatpush1.msra.mxu0 0.0
  %108 = vmatprep.mubr.f32.mxu0 0.0
  %109 = vmatmul.mubr.f32.gmra.mrb[0].mxu0 %v17
  %v110 = vpop.f32.mrb[0].mxu0
  %v111 = vadd.f32 %v42, %v110
  %v112 = vpop.f32.mrb[0].mxu0
  %113 = vmatprep.mubr.f32.mxu0 0.0
  %114 = vmatmul.mubr.f32.gmra.mrb[0].mxu0 %v18
  %v115 = vpop.f32.mrb[0].mxu0
  %v116 = vadd.f32 %v42, %v115
  %v117 = vpop.f32.mrb[0].mxu0
  %118 = vmatprep.mubr.f32.mxu0 0.0
  %119 = vmatmul.mubr.f32.gmra.mrb[0].mxu0 %v19
  %v120 = vpop.f32.mrb[0].mxu0
  %v121 = vadd.f32 %v42, %v120
  %v122 = vpop.f32.mrb[0].mxu0
  %123 = vmatprep.mubr.f32.mxu0 0.0
  %124 = vmatmul.mubr.f32.gmra.mrb[0].mxu0 %v20
  %v125 = vpop.f32.mrb[0].mxu0
  %v126 = vadd.f32 %v42, %v125
  %v127 = vpop.f32.mrb[0].mxu0
  %128 = vdwg.mxu0
  %v129 = vxor.u32 %v111, 2147483648
  %v130 = vxor.u32 %v116, 2147483648
  %v131 = vxor.u32 %v121, 2147483648
  %v132 = vxor.u32 %v126, 2147483648
  %v133 = vmul.f32 %v129, 1.442695
  %v134 = vpow.pop %v133
  %v135 = vmul.f32 %v130, 1.442695
  %v136 = vpow.pop %v135
  %v137 = vmul.f32 %v131, 1.442695
  %v138 = vpow.pop %v137
  %v139 = vmul.f32 %v132, 1.442695
  %v140 = vpow.pop %v139
  %v141 = vadd.f32 %v134, 1.0
  %v142 = vadd.f32 %v136, 1.0
  %v143 = vadd.f32 %v138, 1.0
  %v144 = vadd.f32 %v140, 1.0
  %v145 = vrcp.pop %v141
  %v146 = vmul.f32 1.0, %v145
  %v147 = vrcp.pop %v142
  %v148 = vmul.f32 1.0, %v147
  %v149 = vrcp.pop %v143
  %v150 = vmul.f32 1.0, %v149
  %v151 = vrcp.pop %v144
  %v152 = vmul.f32 1.0, %v151
  %v153 = vmax.f32 %v111, 0.0
  %v154 = vmax.f32 %v116, 0.0
  %v155 = vmax.f32 %v121, 0.0
  %v156 = vmax.f32 %v126, 0.0
  %vm157 = vcmp.ne.f32.partialorder %v111, %v111
  %vm158 = vcmp.ne.f32.partialorder %v116, %v116
  %vm159 = vcmp.ne.f32.partialorder %v121, %v121
  %vm160 = vcmp.ne.f32.partialorder %v126, %v126
  %v161 = vadd.f32 %v111, 0.0
  %v162 = vadd.f32 %v116, 0.0
  %v163 = vadd.f32 %v121, 0.0
  %v164 = vadd.f32 %v126, 0.0
  %v165 = vand.u32 2147483647, %v111
  %v166 = vand.u32 2147483647, %v116
  %v167 = vand.u32 2147483647, %v121
  %v168 = vand.u32 2147483647, %v126
  %v169 = vsub.f32 0.0, %v165
  %v170 = vsub.f32 0.0, %v166
  %v171 = vsub.f32 0.0, %v167
  %v172 = vsub.f32 0.0, %v168
  %v173 = vmul.f32 %v169, 1.442695
  %v174 = vpow.pop %v173
  %v175 = vmul.f32 %v170, 1.442695
  %v176 = vpow.pop %v175
  %v177 = vmul.f32 %v171, 1.442695
  %v178 = vpow.pop %v177
  %v179 = vmul.f32 %v172, 1.442695
  %v180 = vpow.pop %v179
  %v181 = vadd.f32 %v174, 1.0
  %v182 = vlog2.pop %v181
  %v183 = vmul.f32 %v182, 0.6931472
  %v184 = vmul.f32 -0.5, %v174
  %v185 = vadd.f32 %v184, 1.0
  %v186 = vmul.f32 %v185, %v174
  %v187 = vand.u32 2147483647, %v174
  %vm188 = vcmp.lt.f32.partialorder %v187, 0.0004427343
  %v189 = vsel %vm188, %v186, %v183
  %v190 = vadd.f32 %v176, 1.0
  %v191 = vlog2.pop %v190
  %v192 = vmul.f32 %v191, 0.6931472
  %v193 = vmul.f32 -0.5, %v176
  %v194 = vadd.f32 %v193, 1.0
  %v195 = vmul.f32 %v194, %v176
  %v196 = vand.u32 2147483647, %v176
  %vm197 = vcmp.lt.f32.partialorder %v196, 0.0004427343
  %v198 = vsel %vm197, %v195, %v192
  %v199 = vadd.f32 %v178, 1.0
  %v200 = vlog2.pop %v199
  %v201 = vmul.f32 %v200, 0.6931472
  %v202 = vmul.f32 -0.5, %v178
  %v203 = vadd.f32 %v202, 1.0
  %v204 = vmul.f32 %v203, %v178
  %v205 = vand.u32 2147483647, %v178
  %vm206 = vcmp.lt.f32.partialorder %v205, 0.0004427343
  %v207 = vsel %vm206, %v204, %v201
  %v208 = vadd.f32 %v180, 1.0
  %v209 = vlog2.pop %v208
  %v210 = vmul.f32 %v209, 0.6931472
  %v211 = vmul.f32 -0.5, %v180
  %v212 = vadd.f32 %v211, 1.0
  %v213 = vmul.f32 %v212, %v180
  %v214 = vand.u32 2147483647, %v180
  %vm215 = vcmp.lt.f32.partialorder %v214, 0.0004427343
  %v216 = vsel %vm215, %v213, %v210
  %v217 = vadd.f32 %v153, %v189
  %v218 = vadd.f32 %v154, %v198
  %v219 = vadd.f32 %v155, %v207
  %v220 = vadd.f32 %v156, %v216
  %v221 = vsel %vm157, %v161, %v217
  %v222 = vsel %vm158, %v162, %v218
  %v223 = vsel %vm159, %v163, %v219
  %v224 = vsel %vm160, %v164, %v220
  %vm225 = vcmp.ge.f32.partialorder %v146, 0.5
  %vm226 = vcmp.ge.f32.partialorder %v148, 0.5
  %vm227 = vcmp.ge.f32.partialorder %v150, 0.5
  %vm228 = vcmp.ge.f32.partialorder %v152, 0.5
  %v229 = vsel %vm225, 1, 0
  %v230 = vsel %vm226, 1, 0
  %v231 = vsel %vm227, 1, 0
  %v232 = vsel %vm228, 1, 0
  %v233 = vcvt.s32.f32 %v229
  %v234 = vcvt.s32.f32 %v230
  %v235 = vcvt.s32.f32 %v231
  %v236 = vcvt.s32.f32 %v232
  %238 = vset.pattern.permute.xlu0 0
  %239 = vperm.xlu0 %238, %v233
  %v240 = vpop.permute.xlu0 %239
  %243 = vset.pattern.permute.xlu0 0
  %244 = vperm.xlu0 %243, %v234
  %v245 = vpop.permute.xlu0 %244
  %248 = vset.pattern.permute.xlu0 0
  %249 = vperm.xlu0 %248, %v235
  %v250 = vpop.permute.xlu0 %249
  %253 = vset.pattern.permute.xlu0 0
  %254 = vperm.xlu0 %253, %v236
  %v255 = vpop.permute.xlu0 %254
  %v257 = vmul.f32 %v146, %v240
  %v258 = vmul.f32 %v148, %v245
  %v259 = vmul.f32 %v150, %v250
  %v260 = vmul.f32 %v152, %v255
  %v261 = vmul.f32 %v221, %v240
  %v262 = vmul.f32 %v222, %v245
  %v263 = vmul.f32 %v223, %v250
  %v264 = vmul.f32 %v224, %v255
  %v265 = vld [vmem:[%s3] sm:$0x1]
  %267 = vset.pattern.permute.xlu0 1
  %268 = vperm.xlu0 %267, %v257
  %v269 = vpop.permute.xlu0 %268
  %272 = vset.pattern.permute.xlu0 1
  %273 = vperm.xlu0 %272, %v258
  %v274 = vpop.permute.xlu0 %273
  %277 = vset.pattern.permute.xlu0 1
  %278 = vperm.xlu0 %277, %v259
  %v279 = vpop.permute.xlu0 %278
  %282 = vset.pattern.permute.xlu0 1
  %283 = vperm.xlu0 %282, %v260
  %v284 = vpop.permute.xlu0 %283
  %v286 = vlaneseq
  %v287 = vshrl.u32 %v286, 7
  %v288 = vsub.s32 0, %v287
  %v289 = vrot.slane %v265, %v288
  %v290 = vmul.f32 %v269, %v289
  %v291 = vmul.f32 %v274, %v289
  %v292 = vmul.f32 %v279, %v289
  %v293 = vmul.f32 %v284, %v289
  %v294 = vadd.f32 %v111, %v290
  %v295 = vadd.f32 %v116, %v291
  %v296 = vadd.f32 %v121, %v292
  %v297 = vadd.f32 %v126, %v293
  %v298 = vld [vmem:[%s3 + $0x1] sm:$0x1]
  %299 = vset.pattern.permute.xlu0 2
  %300 = vperm.xlu0 %299, %v257
  %v301 = vpop.permute.xlu0 %300
  %303 = vset.pattern.permute.xlu0 2
  %304 = vperm.xlu0 %303, %v258
  %v305 = vpop.permute.xlu0 %304
  %307 = vset.pattern.permute.xlu0 2
  %308 = vperm.xlu0 %307, %v259
  %v309 = vpop.permute.xlu0 %308
  %311 = vset.pattern.permute.xlu0 2
  %312 = vperm.xlu0 %311, %v260
  %v313 = vpop.permute.xlu0 %312
  %v315 = vlaneseq
  %v316 = vshrl.u32 %v315, 7
  %v317 = vsub.s32 0, %v316
  %v318 = vrot.slane %v298, %v317
  %v319 = vmul.f32 %v301, %v318
  %v320 = vmul.f32 %v305, %v318
  %v321 = vmul.f32 %v309, %v318
  %v322 = vmul.f32 %v313, %v318
  %v323 = vadd.f32 %v294, %v319
  %v324 = vadd.f32 %v295, %v320
  %v325 = vadd.f32 %v296, %v321
  %v326 = vadd.f32 %v297, %v322
  %v327 = vxor.u32 %v323, 2147483648
  %v328 = vxor.u32 %v324, 2147483648
  %v329 = vxor.u32 %v325, 2147483648
  %v330 = vxor.u32 %v326, 2147483648
  %v331 = vmul.f32 %v327, 1.442695
  %v332 = vpow.pop %v331
  %v333 = vmul.f32 %v328, 1.442695
  %v334 = vpow.pop %v333
  %v335 = vmul.f32 %v329, 1.442695
  %v336 = vpow.pop %v335
  %v337 = vmul.f32 %v330, 1.442695
  %v338 = vpow.pop %v337
  %v339 = vadd.f32 %v332, 1.0
  %v340 = vadd.f32 %v334, 1.0
  %v341 = vadd.f32 %v336, 1.0
  %v342 = vadd.f32 %v338, 1.0
  %v343 = vrcp.pop %v339
  %v344 = vmul.f32 1.0, %v343
  %v345 = vrcp.pop %v340
  %v346 = vmul.f32 1.0, %v345
  %v347 = vrcp.pop %v341
  %v348 = vmul.f32 1.0, %v347
  %v349 = vrcp.pop %v342
  %v350 = vmul.f32 1.0, %v349
  %vm351 = vcmp.ge.f32.partialorder %v344, 0.5
  %vm352 = vcmp.ge.f32.partialorder %v346, 0.5
  %vm353 = vcmp.ge.f32.partialorder %v348, 0.5
  %vm354 = vcmp.ge.f32.partialorder %v350, 0.5
  %v355 = vsel %vm351, 1, 0
  %v356 = vsel %vm352, 1, 0
  %v357 = vsel %vm353, 1, 0
  %v358 = vsel %vm354, 1, 0
  %v359 = vcvt.s32.f32 %v355
  %v360 = vcvt.s32.f32 %v356
  %v361 = vcvt.s32.f32 %v357
  %v362 = vcvt.s32.f32 %v358
  %363 = vrot.lane.b32.xlu0 %v233, 5
  %v364 = vpop.permute.xlu0 %363
  %365 = vrot.lane.b32.xlu0 %v234, 5
  %v366 = vpop.permute.xlu0 %365
  %367 = vrot.lane.b32.xlu0 %v235, 5
  %v368 = vpop.permute.xlu0 %367
  %369 = vrot.lane.b32.xlu0 %v236, 5
  %v370 = vpop.permute.xlu0 %369
  %v375 = vmul.f32 %v359, %v364
  %v376 = vmul.f32 %v360, %v366
  %v377 = vmul.f32 %v361, %v368
  %v378 = vmul.f32 %v362, %v370
  %380 = vset.pattern.permute.xlu0 5
  %381 = vperm.xlu0 %380, %v375
  %v382 = vpop.permute.xlu0 %381
  %385 = vset.pattern.permute.xlu0 5
  %386 = vperm.xlu0 %385, %v376
  %v387 = vpop.permute.xlu0 %386
  %390 = vset.pattern.permute.xlu0 5
  %391 = vperm.xlu0 %390, %v377
  %v392 = vpop.permute.xlu0 %391
  %395 = vset.pattern.permute.xlu0 5
  %396 = vperm.xlu0 %395, %v378
  %v397 = vpop.permute.xlu0 %396
  %v399 = vmul.f32 %v323, %v382
  %v400 = vmul.f32 %v324, %v387
  %v401 = vmul.f32 %v325, %v392
  %v402 = vmul.f32 %v326, %v397
  %403 = vrot.lane.b32.xlu0 %v233, 1
  %v404 = vpop.permute.xlu0 %403
  %405 = vrot.lane.b32.xlu0 %v234, 1
  %v406 = vpop.permute.xlu0 %405
  %407 = vrot.lane.b32.xlu0 %v235, 1
  %v408 = vpop.permute.xlu0 %407
  %409 = vrot.lane.b32.xlu0 %v236, 1
  %v410 = vpop.permute.xlu0 %409
  %415 = vrot.lane.b32.xlu0 %v257, 1
  %v416 = vpop.permute.xlu0 %415
  %417 = vrot.lane.b32.xlu0 %v258, 1
  %v418 = vpop.permute.xlu0 %417
  %419 = vrot.lane.b32.xlu0 %v259, 1
  %v420 = vpop.permute.xlu0 %419
  %421 = vrot.lane.b32.xlu0 %v260, 1
  %v422 = vpop.permute.xlu0 %421
  %431 = vrot.lane.b32.xlu0 %v261, 1
  %v432 = vpop.permute.xlu0 %431
  %433 = vrot.lane.b32.xlu0 %v262, 1
  %v434 = vpop.permute.xlu0 %433
  %435 = vrot.lane.b32.xlu0 %v263, 1
  %v436 = vpop.permute.xlu0 %435
  %437 = vrot.lane.b32.xlu0 %v264, 1
  %v438 = vpop.permute.xlu0 %437
  %443 = vrot.lane.b32.xlu0 %v375, 1
  %v444 = vpop.permute.xlu0 %443
  %445 = vrot.lane.b32.xlu0 %v376, 1
  %v446 = vpop.permute.xlu0 %445
  %447 = vrot.lane.b32.xlu0 %v377, 1
  %v448 = vpop.permute.xlu0 %447
  %449 = vrot.lane.b32.xlu0 %v378, 1
  %v450 = vpop.permute.xlu0 %449
  %459 = vrot.lane.b32.xlu0 %v399, 1
  %v460 = vpop.permute.xlu0 %459
  %461 = vrot.lane.b32.xlu0 %v400, 1
  %v462 = vpop.permute.xlu0 %461
  %463 = vrot.lane.b32.xlu0 %v401, 1
  %v464 = vpop.permute.xlu0 %463
  %465 = vrot.lane.b32.xlu0 %v402, 1
  %v466 = vpop.permute.xlu0 %465
  %vm471 = vcmask 7168
  %v472 = vsel %vm471, %v146, %v404
  %v473 = vsel %vm471, %v148, %v406
  %v474 = vsel %vm471, %v150, %v408
  %v475 = vsel %vm471, %v152, %v410
  %vm476 = vcmask 15360
  %v477 = vsel %vm476, %v472, %v416
  %v478 = vsel %vm476, %v473, %v418
  %v479 = vsel %vm476, %v474, %v420
  %v480 = vsel %vm476, %v475, %v422
  %vm481 = vcmask 31744
  %v482 = vsel %vm481, %v477, %v432
  %v483 = vsel %vm481, %v478, %v434
  %v484 = vsel %vm481, %v479, %v436
  %v485 = vsel %vm481, %v480, %v438
  %vm486 = vcmask 48128
  %v487 = vsel %vm486, %v482, %v444
  %v488 = vsel %vm486, %v483, %v446
  %v489 = vsel %vm486, %v484, %v448
  %v490 = vsel %vm486, %v485, %v450
  %vm491 = vcmask 56320
  %v492 = vsel %vm491, %v487, %v460
  %v493 = vsel %vm491, %v488, %v462
  %v494 = vsel %vm491, %v489, %v464
  %v495 = vsel %vm491, %v490, %v466
  %vm496 = vcmask 121856
  %v497 = vsel %vm496, %v492, 0.0
  %v498 = vsel %vm496, %v493, 0.0
  %v499 = vsel %vm496, %v494, 0.0
  %v500 = vsel %vm496, %v495, 0.0
  %vm501 = vcmask 130048
  %502 = vst.msk [vmem:[%s4] sm:$0xff] %vm501, %v497
  %503 = vst.msk [vmem:[%s4 + $0x8] sm:$0xff] %vm501, %v498
  %504 = vst.msk [vmem:[%s4 + $0x10] sm:$0xff] %vm501, %v499
  %505 = vst.msk [vmem:[%s4 + $0x18] sm:$0xff] %vm501, %v500
  // Predicated region
  $region18: #{tpu_custom_call.1} parent=0 // pred_check
    _
  $region19: #{tpu_custom_call.1} parent=0 // pred_check_branch
    %507 = sbr.rel (0) target = $region21
  $region20: #{tpu_custom_call.1} parent=0 // pred_region
    _
  $region21: #{tpu_custom_call.1} parent=0 // pred_fallthru
    _
  // Predicated region
  $region22: #{tpu_custom_call.1} parent=0 // pred_check
    _
  $region23: #{tpu_custom_call.1} parent=0 // pred_check_branch
    %509 = sbr.rel (0) target = $region25
  $region24: #{tpu_custom_call.1} parent=0 // pred_region
    _
  $region25: #{tpu_custom_call.1} parent=0 // pred_fallthru
    _

</llo_original>
